<compile_context>
chip_gen: v5e
topology: v5e:2x2
jax: 0.10.0
libtpu: 0.0.40
codegen_flags: <defaults>
</compile_context>

<pallas_src>
import functools
import math

import jax
import jax.numpy as jnp
from jax import lax
from jax.experimental import pallas as pl
from jax.experimental.pallas import tpu as pltpu


def _fused_conv1d_stack_kernel(*refs, ksize, pad, dims, seq_len):
    """All Conv1d + activation layers for one batch tile.

    Layout: channels on sublanes, (batch, seq) folded onto lanes
    (column j = b * L + t).

    refs = (x_ref, w0, b0, w1, b1, ..., o_ref)
      x_ref : (Cin0, Ntile)          Ntile = Btile * L
      wj    : (K, Cout_j, Cin_j)     per-tap weight slabs (VMEM resident)
      bj    : (Cout_j, 1)            bias
      o_ref : (Cout_last, Ntile)     lane-dense output
    """
    n_layers = len(dims) - 1
    x_ref = refs[0]
    w_refs = refs[1:1 + 2 * n_layers:2]
    b_refs = refs[2:2 + 2 * n_layers:2]
    o_ref = refs[1 + 2 * n_layers]

    N = x_ref.shape[1]
    L = seq_len
    inv_sqrt2 = 1.0 / math.sqrt(2.0)

    # Per-tap validity masks: zero the contributions that would read across a
    # sample boundary (this realizes the Conv1d zero padding without a halo).
    # Computed once per grid step, shared by all layers.
    lane = lax.broadcasted_iota(jnp.int32, (1, N), 1)
    t_local = lax.rem(lane, L)                       # position within sample
    tap_masks = []
    for k in range(ksize):
        delta = k - pad                              # input offset read by tap k
        if delta < 0:
            valid = t_local >= (-delta)
        elif delta > 0:
            valid = t_local < (L - delta)
        else:
            valid = None
        tap_masks.append(None if valid is None else valid.astype(jnp.float32))

    h = x_ref[...].astype(jnp.float32)               # (Cin0, N)
    for j in range(n_layers):                        # static unroll over layers
        acc = None
        for k in range(ksize):                       # K accumulating MXU dots
            delta = k - pad
            if delta == 0:
                xk = h
            else:
                # XLU lane rotation (no VMEM copy, unlike the old concatenate).
                xk = pltpu.roll(h, shift=(-delta) % N, axis=1)
            if tap_masks[k] is not None:
                xk = xk * tap_masks[k]               # edge zeros (VPU, cheap)
            contrib = jnp.dot(w_refs[j][k], xk,
                              preferred_element_type=jnp.float32)
            acc = contrib if acc is None else acc + contrib
        acc = acc + b_refs[j][...]                   # (Cout,1) lane-broadcast
        if j < n_layers - 1:
            # Exact (erf-based) GELU -- matches PyTorch nn.GELU() default.
            acc = 0.5 * acc * (1.0 + lax.erf(acc * inv_sqrt2))
            h = acc                                  # stays in VMEM, no HBM trip
        else:
            o_ref[...] = jax.nn.sigmoid(acc).astype(o_ref.dtype)


def conv1d_model(x, params, *, kernel_size=3, padding=1, batch_tile=None):
    """Fused Conv1DModel.forward.

    x      : (B, L, Cin0)
    params : list of (w_pt, b_pt) per layer, PyTorch layout
             w_pt: (Cout, Cin, K), b_pt: (Cout,)
    returns (B, L, Cout_last)
    """
    B, L, cin0 = x.shape
    dims = [int(cin0)] + [int(w.shape[0]) for (w, _) in params]
    K = kernel_size
    pad = padding
    # Stacking layers with identical padding is length-preserving only if:
    assert 2 * pad == K - 1, "fused stack assumes 'same' padding (2*pad == K-1)"
    assert pad < L

    if batch_tile is None:
        batch_tile = B                     # whole batch in one grid step
    assert B % batch_tile == 0
    n_tiles = B // batch_tile
    n_cols = B * L
    tile_cols = batch_tile * L
    if n_tiles > 1:
        # Non-full lane blocks must be 128-multiples ((8,128) BlockSpec rule).
        assert tile_cols % 128 == 0, "batch_tile * L must be a multiple of 128"

    # Channels on sublanes, (B, L) folded onto lanes: column j = b*L + t.
    # Mirrors x.transpose(1, 2); the fold itself is wrapper-side layout plumbing.
    x_cn = jnp.transpose(x, (2, 0, 1)).reshape(cin0, n_cols)

    operands = [x_cn]
    in_specs = [pl.BlockSpec((cin0, tile_cols), lambda i: (0, i))]
    for li, (w_pt, b_pt) in enumerate(params):
        cout, cin, k = w_pt.shape
        assert cin == dims[li] and k == K
        # (Cout, Cin, K) -> (K, Cout, Cin): per-tap weight slabs.
        w_kio = jnp.transpose(w_pt, (2, 0, 1)).astype(jnp.float32)
        operands.append(w_kio)
        in_specs.append(pl.BlockSpec((K, cout, cin), lambda i: (0, 0, 0)))
        operands.append(b_pt.reshape(cout, 1).astype(jnp.float32))
        in_specs.append(pl.BlockSpec((cout, 1), lambda i: (0, 0)))

    kernel = functools.partial(
        _fused_conv1d_stack_kernel,
        ksize=K, pad=pad, dims=tuple(dims), seq_len=L)

    y_cn = pl.pallas_call(
        kernel,
        out_shape=jax.ShapeDtypeStruct((dims[-1], n_cols), x.dtype),
        grid_spec=pltpu.PrefetchScalarGridSpec(
            num_scalar_prefetch=0,
            grid=(n_tiles,),
            in_specs=in_specs,
            out_specs=pl.BlockSpec((dims[-1], tile_cols), lambda i: (0, i)),
        ),
        compiler_params=pltpu.CompilerParams(
            dimension_semantics=("parallel",),
        ),
    )(*operands)

    # (Cout, B*L) -> (B, L, Cout), mirroring the module's second transpose.
    return jnp.transpose(y_cn.reshape(dims[-1], B, L), (1, 2, 0))


def _reference(x, params, padding):
    """Pure-JAX reference in channels-last layout (== PyTorch Conv1DModel)."""
    n = len(params)
    h = x
    for j, (w_pt, b_pt) in enumerate(params):
        w = jnp.transpose(w_pt, (2, 1, 0))            # (K, Cin, Cout) for WIO
        out = lax.conv_general_dilated(
            h, w, window_strides=(1,), padding=[(padding, padding)],
            dimension_numbers=("NWC", "WIO", "NWC"))
        out = out + b_pt
        if j == n - 1:
            out = jax.nn.sigmoid(out)
        else:
            out = jax.nn.gelu(out, approximate=False)
        h = out
    return h


if __name__ == "__main__":
    # dimensions = [in, hidden, out] like Conv1DModel(dimensions)
    dimensions = [8, 16, 8]
    B, L = 4, 32                 # folded lane width B*L = 128 (one vreg of lanes)
    K, padding = 3, 1

    key = jax.random.PRNGKey(0)
    params = []
    for i in range(len(dimensions) - 1):
        cin, cout = dimensions[i], dimensions[i + 1]
        key, kw, kb = jax.random.split(key, 3)
        bound = 1.0 / math.sqrt(cin * K)              # PyTorch Conv1d init range
        w_pt = jax.random.uniform(kw, (cout, cin, K), jnp.float32, -bound, bound)
        b_pt = jax.random.uniform(kb, (cout,), jnp.float32, -bound, bound)
        params.append((w_pt, b_pt))

    key, kx = jax.random.split(key)
    x = jax.random.normal(kx, (B, L, dimensions[0]), jnp.float32)

    y = conv1d_model(x, params, kernel_size=K, padding=padding)
    y = jax.block_until_ready(y)

    y_ref = _reference(x, params, padding)
    assert y.shape == (B, L, dimensions[-1])
    assert jnp.allclose(y, y_ref, rtol=1e-5, atol=1e-5)

    print("KERNEL_OK")
</pallas_src>

<mosaic_0001>
module attributes {stable_mosaic.version = 11 : i64} {
  func.func @_fused_conv1d_stack_kernel(%arg0: i32, %arg1: memref<8x128xf32, #tpu.memory_space<vmem>>, %arg2: memref<3x16x8xf32, #tpu.memory_space<vmem>>, %arg3: memref<16x1xf32, #tpu.memory_space<vmem>>, %arg4: memref<3x8x16xf32, #tpu.memory_space<vmem>>, %arg5: memref<8x1xf32, #tpu.memory_space<vmem>>, %arg6: memref<8x128xf32, #tpu.memory_space<vmem>>) attributes {dimension_semantics = [#tpu.dimension_semantics<parallel>], iteration_bounds = array<i64: 1>, scalar_prefetch = 0 : i64, scratch_operands = 0 : i64, tpu.core_type = #tpu.core_type<tc>, window_params = [{transform_indices = @transform_0, window_bounds = array<i64: 8, 128>}, {pipeline_mode = #tpu.pipeline_mode<synchronous>, transform_indices = @transform_1, window_bounds = array<i64: 3, 16, 8>}, {pipeline_mode = #tpu.pipeline_mode<synchronous>, transform_indices = @transform_2, window_bounds = array<i64: 16, 1>}, {pipeline_mode = #tpu.pipeline_mode<synchronous>, transform_indices = @transform_3, window_bounds = array<i64: 3, 8, 16>}, {pipeline_mode = #tpu.pipeline_mode<synchronous>, transform_indices = @transform_4, window_bounds = array<i64: 8, 1>}, {transform_indices = @transform_5, window_bounds = array<i64: 8, 128>}]} {
    %0 = tpu.iota {dimensions = array<i32: 1>} : vector<1x128xi32>
    %c32_i32 = arith.constant 32 : i32
    %1 = vector.broadcast %c32_i32 : i32 to vector<1x128xi32>
    %2 = arith.remsi %0, %1 : vector<1x128xi32>
    %c1_i32 = arith.constant 1 : i32
    %3 = vector.broadcast %c1_i32 : i32 to vector<1x128xi32>
    %4 = arith.cmpi sge, %2, %3 : vector<1x128xi32>
    %5 = arith.extui %4 : vector<1x128xi1> to vector<1x128xi32>
    %6 = arith.sitofp %5 : vector<1x128xi32> to vector<1x128xf32>
    %c31_i32 = arith.constant 31 : i32
    %7 = vector.broadcast %c31_i32 : i32 to vector<1x128xi32>
    %8 = arith.cmpi slt, %2, %7 : vector<1x128xi32>
    %9 = arith.extui %8 : vector<1x128xi1> to vector<1x128xi32>
    %10 = arith.sitofp %9 : vector<1x128xi32> to vector<1x128xf32>
    %c0 = arith.constant 0 : index
    %c0_0 = arith.constant 0 : index
    %11 = vector.load %arg1[%c0, %c0_0] : memref<8x128xf32, #tpu.memory_space<vmem>>, vector<8x128xf32>
    %c1_i32_1 = arith.constant 1 : i32
    %12 = tpu.dynamic_rotate %11 by %c1_i32_1 dim 1 : vector<8x128xf32>, i32 -> vector<8x128xf32>
    %13 = vector.broadcast %6 : vector<1x128xf32> to vector<8x128xf32>
    %14 = arith.mulf %12, %13 : vector<8x128xf32>
    %c0_2 = arith.constant 0 : index
    %c0_3 = arith.constant 0 : index
    %c0_4 = arith.constant 0 : index
    %15 = vector.load %arg2[%c0_2, %c0_3, %c0_4] : memref<3x16x8xf32, #tpu.memory_space<vmem>>, vector<1x16x8xf32>
    %16 = vector.shape_cast %15 : vector<1x16x8xf32> to vector<16x8xf32>
    %cst = arith.constant dense<0.000000e+00> : vector<16x128xf32>
    %17 = tpu.matmul %16, %14, %cst {dimension_numbers = #tpu.dot_dimension_numbers<[1], [0], [0], [1], [0, 0, 1, 1], [], []>} : vector<16x8xf32>, vector<8x128xf32>, vector<16x128xf32> -> vector<16x128xf32>
    %c1 = arith.constant 1 : index
    %c0_5 = arith.constant 0 : index
    %c0_6 = arith.constant 0 : index
    %18 = vector.load %arg2[%c1, %c0_5, %c0_6] : memref<3x16x8xf32, #tpu.memory_space<vmem>>, vector<1x16x8xf32>
    %19 = vector.shape_cast %18 : vector<1x16x8xf32> to vector<16x8xf32>
    %cst_7 = arith.constant dense<0.000000e+00> : vector<16x128xf32>
    %20 = tpu.matmul %19, %11, %cst_7 {dimension_numbers = #tpu.dot_dimension_numbers<[1], [0], [0], [1], [0, 0, 1, 1], [], []>} : vector<16x8xf32>, vector<8x128xf32>, vector<16x128xf32> -> vector<16x128xf32>
    %21 = arith.addf %17, %20 : vector<16x128xf32>
    %c127_i32 = arith.constant 127 : i32
    %22 = tpu.dynamic_rotate %11 by %c127_i32 dim 1 : vector<8x128xf32>, i32 -> vector<8x128xf32>
    %23 = vector.broadcast %10 : vector<1x128xf32> to vector<8x128xf32>
    %24 = arith.mulf %22, %23 : vector<8x128xf32>
    %c2 = arith.constant 2 : index
    %c0_8 = arith.constant 0 : index
    %c0_9 = arith.constant 0 : index
    %25 = vector.load %arg2[%c2, %c0_8, %c0_9] : memref<3x16x8xf32, #tpu.memory_space<vmem>>, vector<1x16x8xf32>
    %26 = vector.shape_cast %25 : vector<1x16x8xf32> to vector<16x8xf32>
    %cst_10 = arith.constant dense<0.000000e+00> : vector<16x128xf32>
    %27 = tpu.matmul %26, %24, %cst_10 {dimension_numbers = #tpu.dot_dimension_numbers<[1], [0], [0], [1], [0, 0, 1, 1], [], []>} : vector<16x8xf32>, vector<8x128xf32>, vector<16x128xf32> -> vector<16x128xf32>
    %28 = arith.addf %21, %27 : vector<16x128xf32>
    %c0_11 = arith.constant 0 : index
    %c0_12 = arith.constant 0 : index
    %29 = vector.load %arg3[%c0_11, %c0_12] : memref<16x1xf32, #tpu.memory_space<vmem>>, vector<16x1xf32>
    %30 = vector.broadcast %29 : vector<16x1xf32> to vector<16x128xf32>
    %31 = arith.addf %28, %30 : vector<16x128xf32>
    %cst_13 = arith.constant 5.000000e-01 : f32
    %32 = vector.broadcast %cst_13 : f32 to vector<16x128xf32>
    %33 = arith.mulf %32, %31 : vector<16x128xf32>
    %cst_14 = arith.constant 0.707106769 : f32
    %34 = vector.broadcast %cst_14 : f32 to vector<16x128xf32>
    %35 = arith.mulf %31, %34 : vector<16x128xf32>
    %36 = math.erf %35 : vector<16x128xf32>
    %cst_15 = arith.constant 1.000000e+00 : f32
    %37 = vector.broadcast %cst_15 : f32 to vector<16x128xf32>
    %38 = arith.addf %37, %36 : vector<16x128xf32>
    %39 = arith.mulf %33, %38 : vector<16x128xf32>
    %c1_i32_16 = arith.constant 1 : i32
    %40 = tpu.dynamic_rotate %39 by %c1_i32_16 dim 1 : vector<16x128xf32>, i32 -> vector<16x128xf32>
    %41 = vector.broadcast %6 : vector<1x128xf32> to vector<16x128xf32>
    %42 = arith.mulf %40, %41 : vector<16x128xf32>
    %c0_17 = arith.constant 0 : index
    %c0_18 = arith.constant 0 : index
    %c0_19 = arith.constant 0 : index
    %43 = vector.load %arg4[%c0_17, %c0_18, %c0_19] : memref<3x8x16xf32, #tpu.memory_space<vmem>>, vector<1x8x16xf32>
    %44 = vector.shape_cast %43 : vector<1x8x16xf32> to vector<8x16xf32>
    %cst_20 = arith.constant dense<0.000000e+00> : vector<8x128xf32>
    %45 = tpu.matmul %44, %42, %cst_20 {dimension_numbers = #tpu.dot_dimension_numbers<[1], [0], [0], [1], [0, 0, 1, 1], [], []>} : vector<8x16xf32>, vector<16x128xf32>, vector<8x128xf32> -> vector<8x128xf32>
    %c1_21 = arith.constant 1 : index
    %c0_22 = arith.constant 0 : index
    %c0_23 = arith.constant 0 : index
    %46 = vector.load %arg4[%c1_21, %c0_22, %c0_23] : memref<3x8x16xf32, #tpu.memory_space<vmem>>, vector<1x8x16xf32>
    %47 = vector.shape_cast %46 : vector<1x8x16xf32> to vector<8x16xf32>
    %cst_24 = arith.constant dense<0.000000e+00> : vector<8x128xf32>
    %48 = tpu.matmul %47, %39, %cst_24 {dimension_numbers = #tpu.dot_dimension_numbers<[1], [0], [0], [1], [0, 0, 1, 1], [], []>} : vector<8x16xf32>, vector<16x128xf32>, vector<8x128xf32> -> vector<8x128xf32>
    %49 = arith.addf %45, %48 : vector<8x128xf32>
    %c127_i32_25 = arith.constant 127 : i32
    %50 = tpu.dynamic_rotate %39 by %c127_i32_25 dim 1 : vector<16x128xf32>, i32 -> vector<16x128xf32>
    %51 = vector.broadcast %10 : vector<1x128xf32> to vector<16x128xf32>
    %52 = arith.mulf %50, %51 : vector<16x128xf32>
    %c2_26 = arith.constant 2 : index
    %c0_27 = arith.constant 0 : index
    %c0_28 = arith.constant 0 : index
    %53 = vector.load %arg4[%c2_26, %c0_27, %c0_28] : memref<3x8x16xf32, #tpu.memory_space<vmem>>, vector<1x8x16xf32>
    %54 = vector.shape_cast %53 : vector<1x8x16xf32> to vector<8x16xf32>
    %cst_29 = arith.constant dense<0.000000e+00> : vector<8x128xf32>
    %55 = tpu.matmul %54, %52, %cst_29 {dimension_numbers = #tpu.dot_dimension_numbers<[1], [0], [0], [1], [0, 0, 1, 1], [], []>} : vector<8x16xf32>, vector<16x128xf32>, vector<8x128xf32> -> vector<8x128xf32>
    %56 = arith.addf %49, %55 : vector<8x128xf32>
    %c0_30 = arith.constant 0 : index
    %c0_31 = arith.constant 0 : index
    %57 = vector.load %arg5[%c0_30, %c0_31] : memref<8x1xf32, #tpu.memory_space<vmem>>, vector<8x1xf32>
    %58 = vector.broadcast %57 : vector<8x1xf32> to vector<8x128xf32>
    %59 = arith.addf %56, %58 : vector<8x128xf32>
    %60 = arith.negf %59 : vector<8x128xf32>
    %61 = math.exp %60 : vector<8x128xf32>
    %cst_32 = arith.constant 1.000000e+00 : f32
    %62 = vector.broadcast %cst_32 : f32 to vector<8x128xf32>
    %63 = arith.addf %62, %61 : vector<8x128xf32>
    %64 = arith.divf %62, %63 : vector<8x128xf32>
    %c0_33 = arith.constant 0 : index
    %c0_34 = arith.constant 0 : index
    %65 = vector.load %arg6[%c0_33, %c0_34] : memref<8x128xf32, #tpu.memory_space<vmem>>, vector<8x128xf32>
    tpu.vector_store %arg6[%c0_33, %c0_34], %64 {strides = array<i32>} : memref<8x128xf32, #tpu.memory_space<vmem>>, vector<8x128xf32>,
    return
  }
  func.func @transform_0(%arg0: i32) -> (i32, i32) {
    %c0_i32 = arith.constant 0 : i32
    %c0_i32_0 = arith.constant 0 : i32
    return %c0_i32, %arg0 : i32, i32
  }
  func.func @transform_1(%arg0: i32) -> (i32, i32, i32) {
    %c0_i32 = arith.constant 0 : i32
    %c0_i32_0 = arith.constant 0 : i32
    %c0_i32_1 = arith.constant 0 : i32
    %c0_i32_2 = arith.constant 0 : i32
    return %c0_i32, %c0_i32_0, %c0_i32_1 : i32, i32, i32
  }
  func.func @transform_2(%arg0: i32) -> (i32, i32) {
    %c0_i32 = arith.constant 0 : i32
    %c0_i32_0 = arith.constant 0 : i32
    %c0_i32_1 = arith.constant 0 : i32
    return %c0_i32, %c0_i32_0 : i32, i32
  }
  func.func @transform_3(%arg0: i32) -> (i32, i32, i32) {
    %c0_i32 = arith.constant 0 : i32
    %c0_i32_0 = arith.constant 0 : i32
    %c0_i32_1 = arith.constant 0 : i32
    %c0_i32_2 = arith.constant 0 : i32
    return %c0_i32, %c0_i32_0, %c0_i32_1 : i32, i32, i32
  }
  func.func @transform_4(%arg0: i32) -> (i32, i32) {
    %c0_i32 = arith.constant 0 : i32
    %c0_i32_0 = arith.constant 0 : i32
    %c0_i32_1 = arith.constant 0 : i32
    return %c0_i32, %c0_i32_0 : i32, i32
  }
  func.func @transform_5(%arg0: i32) -> (i32, i32) {
    %c0_i32 = arith.constant 0 : i32
    %c0_i32_0 = arith.constant 0 : i32
    return %c0_i32, %arg0 : i32, i32
  }
}

</mosaic_0001>

<llo_original>
// kernel: tpu_custom_call.1
$region0: #{tpu_custom_call.1}
  #allocation0 [shape = 'u32[]', space=smem, size = 0x4, offset = 0x4, fixed_abs, tag = 'smem constant byte address 0x4 - core index']
  #allocation1 [shape = 'u32[72,128]{1,0:T(1,128)}', space=vmem, size = 0x9000, scoped, tag = 'internal scratch']
  %s0 = inlined_call_operand.vmem [shape: f32[8,128], index: 0, kind: input, shape index: {}]
  %s1 = inlined_call_operand.vmem [shape: f32[3,16,8], index: 1, kind: input, shape index: {}]
  %s2 = inlined_call_operand.vmem [shape: f32[16,1], index: 2, kind: input, shape index: {}]
  %s3 = inlined_call_operand.vmem [shape: f32[3,8,16], index: 3, kind: input, shape index: {}]
  %s4 = inlined_call_operand.vmem [shape: f32[8,1], index: 4, kind: input, shape index: {}]
  %s5 = inlined_call_operand.hbm [shape: f32[8,128], index: 5, kind: output, shape index: {}]
  %s6 = sld [smem:[#allocation0]]
  $region30: #{tpu_custom_call.1} parent=0
    _
  %s8 = ssub.s32 1, %s6
  %s9 = scalar_select 0, %s8, %s6
  $region1: #{tpu_custom_call.1} parent=0
    #allocation2 [shape = 'u8[4096]{0}', space=vmem, size = 0x1000, scoped, tag = 'output window, operand 0, single buffered']
    #allocation3 [shape = 's32[1]{0}', space=sflag, size = 0x4, scoped, tag = 'scoped memory for tpu_custom_call.1']
    %10 = vsyncpa [#allocation3], 0
    // Predicated region
    $region2: #{tpu_custom_call.1} parent=1 // pred_check
      _
    $region3: #{tpu_custom_call.1} parent=1 // pred_check_branch
      %12 = sbr.rel (0) target = $region5
    $region4: #{tpu_custom_call.1} parent=1 // pred_region
      _
    $region5: #{tpu_custom_call.1} parent=1 // pred_fallthru
      _
    // Predicated region
    $region6: #{tpu_custom_call.1} parent=1 // pred_check
      _
    $region7: #{tpu_custom_call.1} parent=1 // pred_check_branch
      %14 = sbr.rel (0) target = $region9
    $region8: #{tpu_custom_call.1} parent=1 // pred_region
      _
    $region9: #{tpu_custom_call.1} parent=1 // pred_fallthru
      _
    // Predicated region
    $region10: #{tpu_custom_call.1} parent=1 // pred_check
      _
    $region11: #{tpu_custom_call.1} parent=1 // pred_check_branch
      %16 = sbr.rel (0) target = $region13
    $region12: #{tpu_custom_call.1} parent=1 // pred_region
      _
    $region13: #{tpu_custom_call.1} parent=1 // pred_fallthru
      _
    // Predicated region
    $region14: #{tpu_custom_call.1} parent=1 // pred_check
      _
    $region15: #{tpu_custom_call.1} parent=1 // pred_check_branch
      %18 = sbr.rel (0) target = $region17
    $region16: #{tpu_custom_call.1} parent=1 // pred_region
      _
    $region17: #{tpu_custom_call.1} parent=1 // pred_fallthru
      _
    // Predicated region
    $region18: #{tpu_custom_call.1} parent=1 // pred_check
      _
    $region19: #{tpu_custom_call.1} parent=1 // pred_check_branch
      %20 = sbr.rel (0) target = $region21
    $region20: #{tpu_custom_call.1} parent=1 // pred_region
      _
    $region21: #{tpu_custom_call.1} parent=1 // pred_fallthru
      _
    %v21 = vlaneseq
    %v22 = vand.u32 %v21, 127
    %vm23 = vcmp.lt.s32.totalorder %v22, 0
    %v24 = vsub.s32 0, %v22
    %v25 = vsel %vm23, %v24, %v22
    %v26 = vshrl.u32 %v25, 5
    %v27 = vand.u32 %v25, 31
    %v28 = vsub.s32 0, %v27
    %v29 = vsel %vm23, %v28, %v27
    %vm30 = vcmp.ge.s32.totalorder %v29, 1
    %v31 = vsel %vm30, 1, 0
    %v32 = vcvt.s32.f32 %v31
    %vm33 = vcmp.lt.s32.totalorder %v29, 31
    %v34 = vsel %vm33, 1, 0
    %v35 = vcvt.s32.f32 %v34
    %v36 = vld [vmem:[%s0] sm:$0xff]
    %37 = vrot.lane.b32.xlu0 %v36, 1
    %v38 = vpop.permute.xlu0 %37
    %v39 = vmul.f32 %v38, %v32
    %v40 = vld [vmem:[%s1] sm:$0xff]
    %v41 = vld [vmem:[%s1 + $0x8] sm:$0xff]
    %s42 = scalar_lea.vmem %s1, 16
    %v43 = vld [vmem:[%s42] sm:$0xff]
    %v44 = vld [vmem:[%s42 + $0x8] sm:$0xff]
    %vm45 = vcmask 64512
    %v47 = vsel %vm45, %v43, 0
    %v50 = vsel %vm45, %v44, 0
    %52 = vmatpush.msra.mxu0 0.0
    %53 = vmatpush.msra.mxu0 0.0
    %54 = vmatpush.msra.mxu0 0.0
    %55 = vmatpush.msra.mxu0 0.0
    %56 = vmatpush.msra.mxu0 0.0
    %57 = vmatpush.msra.mxu0 0.0
    %58 = vmatpush.msra.mxu0 0.0
    %59 = vmatpush.msra.mxu0 0.0
    %60 = vmatpush.msra.mxu0 0.0
    %61 = vmatpush.msra.mxu0 0.0
    %62 = vmatpush.msra.mxu0 0.0
    %63 = vmatpush.msra.mxu0 0.0
    %64 = vmatpush.msra.mxu0 0.0
    %65 = vmatpush.msra.mxu0 0.0
    %66 = vmatpush.msra.mxu0 0.0
    %67 = vmatpush.msra.mxu0 %v36
    %68 = vmatmul.f32.gmra.mxu0 %v47
    %v69 = vpop.f32.mrf.mxu0
    %v70 = vadd.f32 0.0, %v69
    %71 = vmatmul.f32.gmra.mxu0 %v50
    %v72 = vpop.f32.mrf.mxu0
    %v73 = vadd.f32 0.0, %v72
    %74 = vdwg.mxu0
    %v76 = vsel %vm45, %v40, 0
    %v79 = vsel %vm45, %v41, 0
    %81 = vmatpush.msra.mxu0 0.0
    %82 = vmatpush.msra.mxu0 0.0
    %83 = vmatpush.msra.mxu0 0.0
    %84 = vmatpush.msra.mxu0 0.0
    %85 = vmatpush.msra.mxu0 0.0
    %86 = vmatpush.msra.mxu0 0.0
    %87 = vmatpush.msra.mxu0 0.0
    %88 = vmatpush.msra.mxu0 0.0
    %89 = vmatpush.msra.mxu0 0.0
    %90 = vmatpush.msra.mxu0 0.0
    %91 = vmatpush.msra.mxu0 0.0
    %92 = vmatpush.msra.mxu0 0.0
    %93 = vmatpush.msra.mxu0 0.0
    %94 = vmatpush.msra.mxu0 0.0
    %95 = vmatpush.msra.mxu0 0.0
    %96 = vmatpush.msra.mxu0 %v39
    %97 = vmatmul.f32.gmra.mxu0 %v76
    %v98 = vpop.f32.mrf.mxu0
    %v99 = vadd.f32 %v70, %v98
    %100 = vmatmul.f32.gmra.mxu0 %v79
    %v101 = vpop.f32.mrf.mxu0
    %v102 = vadd.f32 %v73, %v101
    %103 = vdwg.mxu0
    %104 = vrot.lane.b32.xlu0 %v36, 127
    %v105 = vpop.permute.xlu0 %104
    %v106 = vmul.f32 %v105, %v35
    %s107 = scalar_lea.vmem %s1, 32
    %v108 = vld [vmem:[%s107] sm:$0xff]
    %v109 = vld [vmem:[%s107 + $0x8] sm:$0xff]
    %v111 = vsel %vm45, %v108, 0
    %v114 = vsel %vm45, %v109, 0
    %116 = vmatpush.msra.mxu0 0.0
    %117 = vmatpush.msra.mxu0 0.0
    %118 = vmatpush.msra.mxu0 0.0
    %119 = vmatpush.msra.mxu0 0.0
    %120 = vmatpush.msra.mxu0 0.0
    %121 = vmatpush.msra.mxu0 0.0
    %122 = vmatpush.msra.mxu0 0.0
    %123 = vmatpush.msra.mxu0 0.0
    %124 = vmatpush.msra.mxu0 0.0
    %125 = vmatpush.msra.mxu0 0.0
    %126 = vmatpush.msra.mxu0 0.0
    %127 = vmatpush.msra.mxu0 0.0
    %128 = vmatpush.msra.mxu0 0.0
    %129 = vmatpush.msra.mxu0 0.0
    %130 = vmatpush.msra.mxu0 0.0
    %131 = vmatpush.msra.mxu0 %v106
    %132 = vmatmul.f32.gmra.mxu0 %v111
    %v133 = vpop.f32.mrf.mxu0
    %v134 = vadd.f32 0.0, %v133
    %135 = vmatmul.f32.gmra.mxu0 %v114
    %v136 = vpop.f32.mrf.mxu0
    %v137 = vadd.f32 0.0, %v136
    %138 = vdwg.mxu0
    %v139 = vadd.f32 %v99, %v134
    %v140 = vadd.f32 %v102, %v137
    %v141 = vld [vmem:[%s2] sm:$0xff]
    %v142 = vld [vmem:[%s2 + $0x8] sm:$0xff]
    %144 = vset.pattern.permute.xlu0 0
    %145 = vperm.xlu0 %144, %v141
    %v146 = vpop.permute.xlu0 %145
    %149 = vset.pattern.permute.xlu0 0
    %150 = vperm.xlu0 %149, %v142
    %v151 = vpop.permute.xlu0 %150
    %v153 = vadd.f32 %v139, %v146
    %v154 = vadd.f32 %v140, %v151
    %v155 = vmul.f32 %v153, 0.5
    %v156 = vmul.f32 %v154, 0.5
    %v157 = vmul.f32 %v153, 0.70710677
    %v158 = vmul.f32 %v154, 0.70710677
    %v159 = vmul.f32 %v157, %v157
    %v160 = vmin.f32 16.0, %v159
    %v161 = vmul.f32 %v160, 2.1237322e-06
    %v162 = vadd.f32 %v161, 0.00028619796
    %v163 = vmul.f32 %v160, %v162
    %v164 = vadd.f32 %v163, 0.0036580483
    %v165 = vmul.f32 %v160, %v164
    %v166 = vadd.f32 %v165, 0.05243302
    %v167 = vmul.f32 %v160, %v166
    %v168 = vadd.f32 %v167, 0.18741608
    %v169 = vmul.f32 %v160, %v168
    %v170 = vadd.f32 %v169, 1.1283791
    %v171 = vmul.f32 %v157, %v170
    %v172 = vmul.f32 %v160, 3.8918573e-05
    %v173 = vadd.f32 %v172, 0.001143296
    %v174 = vmul.f32 %v160, %v173
    %v175 = vadd.f32 %v174, 0.014752088
    %v176 = vmul.f32 %v160, %v175
    %v177 = vadd.f32 %v176, 0.112945676
    %v178 = vmul.f32 %v160, %v177
    %v179 = vadd.f32 %v178, 0.4994258
    %v180 = vmul.f32 %v160, %v179
    %v181 = vadd.f32 %v180, 1.0
    %v182 = vrcp.pop %v181
    %v183 = vmul.f32 %v181, %v182
    %v184 = vsub.f32 1.0, %v183
    %v185 = vmul.f32 %v182, %v184
    %v186 = vadd.f32 %v182, %v185
    %vm187 = vweird.f32 %v181
    %vm188 = vweird.f32 %v182
    %vm189 = vmor %vm187, %vm188
    %v190 = vsel %vm189, %v182, %v186
    %v191 = vand.u32 2147483647, %v181
    %vm192 = vcmp.eq.f32.partialorder %v191, 8.507059e+37
    %v193 = vand.u32 %v181, 2147483648
    %v194 = vor.u32 1.1754944e-38, %v193
    %v195 = vsel %vm192, %v194, %v190
    %v196 = vmul.f32 %v171, %v195
    %v197 = vmin.f32 %v196, 1.0
    %v198 = vmax.f32 %v197, -1.0
    %v199 = vmul.f32 %v158, %v158
    %v200 = vmin.f32 16.0, %v199
    %v201 = vmul.f32 %v200, 2.1237322e-06
    %v202 = vadd.f32 %v201, 0.00028619796
    %v203 = vmul.f32 %v200, %v202
    %v204 = vadd.f32 %v203, 0.0036580483
    %v205 = vmul.f32 %v200, %v204
    %v206 = vadd.f32 %v205, 0.05243302
    %v207 = vmul.f32 %v200, %v206
    %v208 = vadd.f32 %v207, 0.18741608
    %v209 = vmul.f32 %v200, %v208
    %v210 = vadd.f32 %v209, 1.1283791
    %v211 = vmul.f32 %v158, %v210
    %v212 = vmul.f32 %v200, 3.8918573e-05
    %v213 = vadd.f32 %v212, 0.001143296
    %v214 = vmul.f32 %v200, %v213
    %v215 = vadd.f32 %v214, 0.014752088
    %v216 = vmul.f32 %v200, %v215
    %v217 = vadd.f32 %v216, 0.112945676
    %v218 = vmul.f32 %v200, %v217
    %v219 = vadd.f32 %v218, 0.4994258
    %v220 = vmul.f32 %v200, %v219
    %v221 = vadd.f32 %v220, 1.0
    %v222 = vrcp.pop %v221
    %v223 = vmul.f32 %v221, %v222
    %v224 = vsub.f32 1.0, %v223
    %v225 = vmul.f32 %v222, %v224
    %v226 = vadd.f32 %v222, %v225
    %vm227 = vweird.f32 %v221
    %vm228 = vweird.f32 %v222
    %vm229 = vmor %vm227, %vm228
    %v230 = vsel %vm229, %v222, %v226
    %v231 = vand.u32 2147483647, %v221
    %vm232 = vcmp.eq.f32.partialorder %v231, 8.507059e+37
    %v233 = vand.u32 %v221, 2147483648
    %v234 = vor.u32 1.1754944e-38, %v233
    %v235 = vsel %vm232, %v234, %v230
    %v236 = vmul.f32 %v211, %v235
    %v237 = vmin.f32 %v236, 1.0
    %v238 = vmax.f32 %v237, -1.0
    %v239 = vadd.f32 %v198, 1.0
    %v240 = vadd.f32 %v238, 1.0
    %v241 = vmul.f32 %v155, %v239
    %v242 = vmul.f32 %v156, %v240
    %243 = vrot.lane.b32.xlu0 %v241, 1
    %v244 = vpop.permute.xlu0 %243
    %245 = vrot.lane.b32.xlu0 %v242, 1
    %v246 = vpop.permute.xlu0 %245
    %v247 = vmul.f32 %v244, %v32
    %v248 = vmul.f32 %v246, %v32
    %v249 = vld [vmem:[%s3] sm:$0xff]
    %s250 = scalar_lea.vmem %s3, 8
    %v251 = vld [vmem:[%s250] sm:$0xff]
    %vm252 = vcmask 130048
    %v254 = vsel %vm252, %v251, 0
    %256 = vmatpush.msra.mxu0 0.0
    %257 = vmatpush.msra.mxu0 0.0
    %258 = vmatpush.msra.mxu0 0.0
    %259 = vmatpush.msra.mxu0 0.0
    %260 = vmatpush.msra.mxu0 0.0
    %261 = vmatpush.msra.mxu0 0.0
    %262 = vmatpush.msra.mxu0 0.0
    %263 = vmatpush.msra.mxu0 0.0
    %264 = vmatpush.msra.mxu0 0.0
    %265 = vmatpush.msra.mxu0 0.0
    %266 = vmatpush.msra.mxu0 0.0
    %267 = vmatpush.msra.mxu0 0.0
    %268 = vmatpush.msra.mxu0 0.0
    %269 = vmatpush.msra.mxu0 0.0
    %270 = vmatpush.msra.mxu0 %v242
    %271 = vmatpush.msra.mxu0 %v241
    %272 = vmatmul.f32.gmra.mxu0 %v254
    %v273 = vpop.f32.mrf.mxu0
    %v274 = vadd.f32 0.0, %v273
    %275 = vdwg.mxu0
    %v277 = vsel %vm252, %v249, 0
    %279 = vmatpush.msra.mxu0 0.0
    %280 = vmatpush.msra.mxu0 0.0
    %281 = vmatpush.msra.mxu0 0.0
    %282 = vmatpush.msra.mxu0 0.0
    %283 = vmatpush.msra.mxu0 0.0
    %284 = vmatpush.msra.mxu0 0.0
    %285 = vmatpush.msra.mxu0 0.0
    %286 = vmatpush.msra.mxu0 0.0
    %287 = vmatpush.msra.mxu0 0.0
    %288 = vmatpush.msra.mxu0 0.0
    %289 = vmatpush.msra.mxu0 0.0
    %290 = vmatpush.msra.mxu0 0.0
    %291 = vmatpush.msra.mxu0 0.0
    %292 = vmatpush.msra.mxu0 0.0
    %293 = vmatpush.msra.mxu0 %v248
    %294 = vmatpush.msra.mxu0 %v247
    %295 = vmatmul.f32.gmra.mxu0 %v277
    %v296 = vpop.f32.mrf.mxu0
    %v297 = vadd.f32 %v274, %v296
    %298 = vdwg.mxu0
    %299 = vrot.lane.b32.xlu0 %v241, 127
    %v300 = vpop.permute.xlu0 %299
    %301 = vrot.lane.b32.xlu0 %v242, 127
    %v302 = vpop.permute.xlu0 %301
    %v303 = vmul.f32 %v300, %v35
    %v304 = vmul.f32 %v302, %v35
    %s305 = scalar_lea.vmem %s3, 16
    %v306 = vld [vmem:[%s305] sm:$0xff]
    %v308 = vsel %vm252, %v306, 0
    %310 = vmatpush.msra.mxu0 0.0
    %311 = vmatpush.msra.mxu0 0.0
    %312 = vmatpush.msra.mxu0 0.0
    %313 = vmatpush.msra.mxu0 0.0
    %314 = vmatpush.msra.mxu0 0.0
    %315 = vmatpush.msra.mxu0 0.0
    %316 = vmatpush.msra.mxu0 0.0
    %317 = vmatpush.msra.mxu0 0.0
    %318 = vmatpush.msra.mxu0 0.0
    %319 = vmatpush.msra.mxu0 0.0
    %320 = vmatpush.msra.mxu0 0.0
    %321 = vmatpush.msra.mxu0 0.0
    %322 = vmatpush.msra.mxu0 0.0
    %323 = vmatpush.msra.mxu0 0.0
    %324 = vmatpush.msra.mxu0 %v304
    %325 = vmatpush.msra.mxu0 %v303
    %326 = vmatmul.f32.gmra.mxu0 %v308
    %v327 = vpop.f32.mrf.mxu0
    %v328 = vadd.f32 0.0, %v327
    %329 = vdwg.mxu0
    %v330 = vadd.f32 %v297, %v328
    %v331 = vld [vmem:[%s4] sm:$0xff]
    %333 = vset.pattern.permute.xlu0 0
    %334 = vperm.xlu0 %333, %v331
    %v335 = vpop.permute.xlu0 %334
    %v337 = vadd.f32 %v330, %v335
    %v338 = vxor.u32 %v337, 2147483648
    %v339 = vmul.f32 %v338, 1.442695
    %v340 = vpow.pop %v339
    %v341 = vadd.f32 %v340, 1.0
    %v342 = vrcp.pop %v341
    %v343 = vmul.f32 %v341, %v342
    %v344 = vsub.f32 1.0, %v343
    %v345 = vmul.f32 %v342, %v344
    %v346 = vadd.f32 %v342, %v345
    %vm347 = vweird.f32 %v341
    %vm348 = vweird.f32 %v342
    %vm349 = vmor %vm347, %vm348
    %v350 = vsel %vm349, %v342, %v346
    %v351 = vand.u32 2147483647, %v341
    %vm352 = vcmp.eq.f32.partialorder %v351, 8.507059e+37
    %v353 = vand.u32 %v341, 2147483648
    %v354 = vor.u32 1.1754944e-38, %v353
    %v355 = vsel %vm352, %v354, %v350
    %v356 = vmul.f32 1.0, %v355
    %357 = vst [vmem:[#allocation2] sm:$0xff] %v356
    // Predicated region
    $region22: #{tpu_custom_call.1} parent=1 // pred_check
      _
    $region23: #{tpu_custom_call.1} parent=1 // pred_check_branch
      %359 = sbr.rel (0) target = $region25
    $region24: #{tpu_custom_call.1} parent=1 // pred_region
      %361 = vsyncadd [#allocation3], 0
      %s363 = sshll.u32 [#allocation2], 4
      %s364 = int_to_ptr.vmem [resolvable:$true] %s363
      %s365 = sshll.u32 %s5, 4
      %s366 = int_to_ptr.hbm [resolvable:$true] %s365
      %368 = dma.vmem_to_hbm [thread:$0]  %s364, 128, %s366, [#allocation3]
    $region25: #{tpu_custom_call.1} parent=1 // pred_fallthru
      _
    // Predicated region
    $region26: #{tpu_custom_call.1} parent=1 // pred_check
      _
    $region27: #{tpu_custom_call.1} parent=1 // pred_check_branch
      %370 = sbr.rel (0) target = $region29
    $region28: #{tpu_custom_call.1} parent=1 // pred_region
      %372 = dma.done [#allocation3], 128
    $region29: #{tpu_custom_call.1} parent=1 // pred_fallthru
      _
    %373 = vsyncpa [#allocation3], 1

</llo_original>
